<compile_context>
chip_gen: v7x
topology: tpu7x:2x2x1
jax: 0.10.0
libtpu: 0.0.40
codegen_flags: <defaults>
</compile_context>

<pallas_src>
import functools

import jax
import jax.numpy as jnp
from jax.experimental import pallas as pl
from jax.experimental.pallas import tpu as pltpu


def _round_up(a, m):
    return ((a + m - 1) // m) * m


def _cdiv(a, b):
    return -(-a // b)


def _stable_sigmoid(z):
    """sigmoid(z) without overflow; exp and reciprocal both run on the EUP."""
    e = jnp.exp(-jnp.abs(z))                       # argument <= 0 -> no overflow
    r = pl.reciprocal(1.0 + e, approx=True)        # EUP vrcp, off the VALU path
    return jnp.where(z >= 0.0, r, e * r)


def adversary_kernel(x_ref,
                     w1_ref, b1_ref,
                     w2_ref, b2_ref,
                     w3_ref, b3_ref,
                     w4_ref, b4_ref,
                     o_ref):
    """Full 4-layer MLP forward for one feature-major (n_input, bb) batch tile.

    All tensors are (features, batch): batch sits on the 128-lane axis, so the
    activations, the elementwise math and the output store are lane-dense.
    Weights are (out_features, in_features), biases are (out_features, 1).
    Everything is f32 (accumulation and elementwise).
    """
    x = x_ref[...]                                                  # (n_in, bb)

    # Layer 1 + ReLU
    h = jnp.dot(w1_ref[...], x, preferred_element_type=jnp.float32)
    h = jnp.maximum(h + b1_ref[...], 0.0)

    # Layer 2 + ReLU
    h = jnp.dot(w2_ref[...], h, preferred_element_type=jnp.float32)
    h = jnp.maximum(h + b2_ref[...], 0.0)

    # Layer 3 + ReLU
    h = jnp.dot(w3_ref[...], h, preferred_element_type=jnp.float32)
    h = jnp.maximum(h + b3_ref[...], 0.0)

    # Layer 4 + sigmoid
    z = jnp.dot(w4_ref[...], h, preferred_element_type=jnp.float32) + b4_ref[...]
    o_ref[...] = _stable_sigmoid(z).astype(o_ref.dtype)


def adversary_forward(x, params, *, block_b=2048, min_grid_steps=2,
                      vmem_limit_bytes=32 * 1024 * 1024):
    """Forward pass of Adversary.

    x: (B, n_input) float32.
    params: dict with PyTorch-native layouts: w* (out, in), b* (out,).

    Tiling: 1-D grid over the batch.  The batch is the lane axis inside the
    kernel, so the tile bb is a multiple of 128.  block_b ~2048 is a good
    default on v5e/v6e (128 MiB VMEM); on v7x (64 MiB VMEM, 2 TCs) prefer a
    moderate bb with more grid steps - min_grid_steps>=2 guarantees both
    TensorCores get work whenever the batch is large enough.
    Weights/biases (<10 KB) stay VMEM-resident via constant index_maps.
    """
    B, n_input = x.shape
    w1, w2, w3, w4 = params["w1"], params["w2"], params["w3"], params["w4"]
    b1, b2, b3, b4 = params["b1"], params["b2"], params["b3"], params["b4"]
    n_hidden = w1.shape[0]
    n_sensitive = w4.shape[0]
    n_sens_pad = _round_up(n_sensitive, 8)          # full-sublane output stores

    # ---- batch tiling: lane axis, multiples of 128 ------------------------
    B128 = _round_up(B, 128)
    bb = min(max(128, _round_up(block_b, 128)), B128)
    steps = max(min_grid_steps, _cdiv(B128, bb))
    bb = _round_up(_cdiv(B128, steps), 128)
    steps = _cdiv(B128, bb)
    B_pad = steps * bb

    # ---- feature-major x: (n_input, B_pad), zero-padded batch columns -----
    x_t = jnp.asarray(x, jnp.float32).T
    if B_pad != B:
        x_t = jnp.pad(x_t, ((0, 0), (0, B_pad - B)))

    # ---- pad the sensitive dim to a sublane multiple -----------------------
    if n_sens_pad != n_sensitive:
        w4 = jnp.pad(w4, ((0, n_sens_pad - n_sensitive), (0, 0)))
        b4 = jnp.pad(b4, ((0, n_sens_pad - n_sensitive),))

    # Biases as (out, 1) columns -> lane-broadcast inside the kernel.
    b1c, b2c, b3c, b4c = (b.reshape(-1, 1).astype(jnp.float32)
                          for b in (b1, b2, b3, b4))
    w1, w2, w3, w4 = (w.astype(jnp.float32) for w in (w1, w2, w3, w4))

    def w_spec(a):   # whole-array, VMEM-resident (constant index_map)
        return pl.BlockSpec(a.shape, lambda i: (0, 0))

    grid_spec = pltpu.PrefetchScalarGridSpec(
        num_scalar_prefetch=0,
        grid=(steps,),
        in_specs=[
            pl.BlockSpec((n_input, bb), lambda i: (0, i)),          # x tile
            w_spec(w1), w_spec(b1c),                                # layer 1
            w_spec(w2), w_spec(b2c),                                # layer 2
            w_spec(w3), w_spec(b3c),                                # layer 3
            w_spec(w4), w_spec(b4c),                                # layer 4
        ],
        out_specs=pl.BlockSpec((n_sens_pad, bb), lambda i: (0, i)),
    )

    out = pl.pallas_call(
        adversary_kernel,
        out_shape=jax.ShapeDtypeStruct((n_sens_pad, B_pad), jnp.float32),
        grid_spec=grid_spec,
        compiler_params=pltpu.CompilerParams(
            dimension_semantics=("parallel",),
            vmem_limit_bytes=vmem_limit_bytes),
    )(x_t, w1, b1c, w2, b2c, w3, b3c, w4, b4c)

    # Undo the feature-major / padded layout (cheap HBM-side plumbing).
    return out[:n_sensitive, :B].T


def init_params(key, n_input, n_sensitive, n_hidden=32):
    """Deterministic init mimicking nn.Linear: uniform(+/- 1/sqrt(fan_in)),
    weights stored (out_features, in_features), biases (out_features,)."""
    def linear(k, fan_in, fan_out):
        kw, kb = jax.random.split(k)
        bound = 1.0 / jnp.sqrt(fan_in)
        w = jax.random.uniform(kw, (fan_out, fan_in), jnp.float32, -bound, bound)
        b = jax.random.uniform(kb, (fan_out,), jnp.float32, -bound, bound)
        return w, b

    k1, k2, k3, k4 = jax.random.split(key, 4)
    w1, b1 = linear(k1, n_input, n_hidden)
    w2, b2 = linear(k2, n_hidden, n_hidden)
    w3, b3 = linear(k3, n_hidden, n_hidden)
    w4, b4 = linear(k4, n_hidden, n_sensitive)
    return dict(w1=w1, b1=b1, w2=w2, b2=b2, w3=w3, b3=b3, w4=w4, b4=b4)


def adversary_ref(x, p):
    """Pure-JAX f32 reference, numerically equivalent to the PyTorch forward."""
    dot = functools.partial(jnp.dot, precision=jax.lax.Precision.HIGHEST)
    h = jnp.maximum(dot(x, p["w1"].T) + p["b1"], 0.0)
    h = jnp.maximum(dot(h, p["w2"].T) + p["b2"], 0.0)
    h = jnp.maximum(dot(h, p["w3"].T) + p["b3"], 0.0)
    z = dot(h, p["w4"].T) + p["b4"]
    return jax.nn.sigmoid(z)


if __name__ == "__main__":
    key = jax.random.PRNGKey(0)
    kx, kp = jax.random.split(key)

    batch, n_input, n_sensitive, n_hidden = 512, 16, 4, 32
    x = jax.random.normal(kx, (batch, n_input), jnp.float32)
    params = init_params(kp, n_input, n_sensitive, n_hidden)

    # batch=512 -> two 256-lane grid steps: both v7x TensorCores get work.
    out = adversary_forward(x, params, block_b=2048)
    out = jax.block_until_ready(out)
    assert out.shape == (batch, n_sensitive)

    ref = adversary_ref(x, params)
    assert jnp.max(jnp.abs(out - ref)) < 2e-2, jnp.max(jnp.abs(out - ref))

    # Ragged batch (non-multiple of 128) exercises the zero-pad + slice path.
    out_ragged = adversary_forward(x[:300], params, block_b=2048)
    out_ragged = jax.block_until_ready(out_ragged)
    assert out_ragged.shape == (300, n_sensitive)
    assert jnp.max(jnp.abs(out_ragged - ref[:300])) < 2e-2

    print("KERNEL_OK")
</pallas_src>

<mosaic_0001>
module attributes {stable_mosaic.version = 11 : i64} {
  func.func @adversary_kernel(%arg0: i32, %arg1: memref<16x256xf32, #tpu.memory_space<vmem>>, %arg2: memref<32x16xf32, #tpu.memory_space<vmem>>, %arg3: memref<32x1xf32, #tpu.memory_space<vmem>>, %arg4: memref<32x32xf32, #tpu.memory_space<vmem>>, %arg5: memref<32x1xf32, #tpu.memory_space<vmem>>, %arg6: memref<32x32xf32, #tpu.memory_space<vmem>>, %arg7: memref<32x1xf32, #tpu.memory_space<vmem>>, %arg8: memref<8x32xf32, #tpu.memory_space<vmem>>, %arg9: memref<8x1xf32, #tpu.memory_space<vmem>>, %arg10: memref<8x256xf32, #tpu.memory_space<vmem>>) attributes {dimension_semantics = [#tpu.dimension_semantics<parallel>], iteration_bounds = array<i64: 2>, scalar_prefetch = 0 : i64, scratch_operands = 0 : i64, tpu.core_type = #tpu.core_type<tc>, window_params = [{transform_indices = @transform_0, window_bounds = array<i64: 16, 256>}, {pipeline_mode = #tpu.pipeline_mode<synchronous>, transform_indices = @transform_1, window_bounds = array<i64: 32, 16>}, {pipeline_mode = #tpu.pipeline_mode<synchronous>, transform_indices = @transform_2, window_bounds = array<i64: 32, 1>}, {pipeline_mode = #tpu.pipeline_mode<synchronous>, transform_indices = @transform_3, window_bounds = array<i64: 32, 32>}, {pipeline_mode = #tpu.pipeline_mode<synchronous>, transform_indices = @transform_4, window_bounds = array<i64: 32, 1>}, {pipeline_mode = #tpu.pipeline_mode<synchronous>, transform_indices = @transform_5, window_bounds = array<i64: 32, 32>}, {pipeline_mode = #tpu.pipeline_mode<synchronous>, transform_indices = @transform_6, window_bounds = array<i64: 32, 1>}, {pipeline_mode = #tpu.pipeline_mode<synchronous>, transform_indices = @transform_7, window_bounds = array<i64: 8, 32>}, {pipeline_mode = #tpu.pipeline_mode<synchronous>, transform_indices = @transform_8, window_bounds = array<i64: 8, 1>}, {transform_indices = @transform_9, window_bounds = array<i64: 8, 256>}]} {
    %c0 = arith.constant 0 : index
    %c0_0 = arith.constant 0 : index
    %0 = vector.load %arg1[%c0, %c0_0] : memref<16x256xf32, #tpu.memory_space<vmem>>, vector<16x256xf32>
    %c0_1 = arith.constant 0 : index
    %c0_2 = arith.constant 0 : index
    %1 = vector.load %arg2[%c0_1, %c0_2] : memref<32x16xf32, #tpu.memory_space<vmem>>, vector<32x16xf32>
    %cst = arith.constant dense<0.000000e+00> : vector<32x256xf32>
    %2 = tpu.matmul %1, %0, %cst {dimension_numbers = #tpu.dot_dimension_numbers<[1], [0], [0], [1], [0, 0, 1, 1], [], []>} : vector<32x16xf32>, vector<16x256xf32>, vector<32x256xf32> -> vector<32x256xf32>
    %c0_3 = arith.constant 0 : index
    %c0_4 = arith.constant 0 : index
    %3 = vector.load %arg3[%c0_3, %c0_4] : memref<32x1xf32, #tpu.memory_space<vmem>>, vector<32x1xf32>
    %4 = vector.broadcast %3 : vector<32x1xf32> to vector<32x256xf32>
    %5 = arith.addf %2, %4 : vector<32x256xf32>
    %cst_5 = arith.constant 0.000000e+00 : f32
    %6 = vector.broadcast %cst_5 : f32 to vector<32x256xf32>
    %7 = arith.maximumf %5, %6 : vector<32x256xf32>
    %c0_6 = arith.constant 0 : index
    %c0_7 = arith.constant 0 : index
    %8 = vector.load %arg4[%c0_6, %c0_7] : memref<32x32xf32, #tpu.memory_space<vmem>>, vector<32x32xf32>
    %cst_8 = arith.constant dense<0.000000e+00> : vector<32x256xf32>
    %9 = tpu.matmul %8, %7, %cst_8 {dimension_numbers = #tpu.dot_dimension_numbers<[1], [0], [0], [1], [0, 0, 1, 1], [], []>} : vector<32x32xf32>, vector<32x256xf32>, vector<32x256xf32> -> vector<32x256xf32>
    %c0_9 = arith.constant 0 : index
    %c0_10 = arith.constant 0 : index
    %10 = vector.load %arg5[%c0_9, %c0_10] : memref<32x1xf32, #tpu.memory_space<vmem>>, vector<32x1xf32>
    %11 = vector.broadcast %10 : vector<32x1xf32> to vector<32x256xf32>
    %12 = arith.addf %9, %11 : vector<32x256xf32>
    %cst_11 = arith.constant 0.000000e+00 : f32
    %13 = vector.broadcast %cst_11 : f32 to vector<32x256xf32>
    %14 = arith.maximumf %12, %13 : vector<32x256xf32>
    %c0_12 = arith.constant 0 : index
    %c0_13 = arith.constant 0 : index
    %15 = vector.load %arg6[%c0_12, %c0_13] : memref<32x32xf32, #tpu.memory_space<vmem>>, vector<32x32xf32>
    %cst_14 = arith.constant dense<0.000000e+00> : vector<32x256xf32>
    %16 = tpu.matmul %15, %14, %cst_14 {dimension_numbers = #tpu.dot_dimension_numbers<[1], [0], [0], [1], [0, 0, 1, 1], [], []>} : vector<32x32xf32>, vector<32x256xf32>, vector<32x256xf32> -> vector<32x256xf32>
    %c0_15 = arith.constant 0 : index
    %c0_16 = arith.constant 0 : index
    %17 = vector.load %arg7[%c0_15, %c0_16] : memref<32x1xf32, #tpu.memory_space<vmem>>, vector<32x1xf32>
    %18 = vector.broadcast %17 : vector<32x1xf32> to vector<32x256xf32>
    %19 = arith.addf %16, %18 : vector<32x256xf32>
    %cst_17 = arith.constant 0.000000e+00 : f32
    %20 = vector.broadcast %cst_17 : f32 to vector<32x256xf32>
    %21 = arith.maximumf %19, %20 : vector<32x256xf32>
    %c0_18 = arith.constant 0 : index
    %c0_19 = arith.constant 0 : index
    %22 = vector.load %arg8[%c0_18, %c0_19] : memref<8x32xf32, #tpu.memory_space<vmem>>, vector<8x32xf32>
    %cst_20 = arith.constant dense<0.000000e+00> : vector<8x256xf32>
    %23 = tpu.matmul %22, %21, %cst_20 {dimension_numbers = #tpu.dot_dimension_numbers<[1], [0], [0], [1], [0, 0, 1, 1], [], []>} : vector<8x32xf32>, vector<32x256xf32>, vector<8x256xf32> -> vector<8x256xf32>
    %c0_21 = arith.constant 0 : index
    %c0_22 = arith.constant 0 : index
    %24 = vector.load %arg9[%c0_21, %c0_22] : memref<8x1xf32, #tpu.memory_space<vmem>>, vector<8x1xf32>
    %25 = vector.broadcast %24 : vector<8x1xf32> to vector<8x256xf32>
    %26 = arith.addf %23, %25 : vector<8x256xf32>
    %27 = math.absf %26 : vector<8x256xf32>
    %cst_23 = arith.constant 0.000000e+00 : f32
    %28 = vector.broadcast %cst_23 : f32 to vector<8x256xf32>
    %29 = arith.subf %28, %27 : vector<8x256xf32>
    %30 = math.exp %29 : vector<8x256xf32>
    %cst_24 = arith.constant 1.000000e+00 : f32
    %31 = vector.broadcast %cst_24 : f32 to vector<8x256xf32>
    %32 = arith.addf %31, %30 : vector<8x256xf32>
    %33 = tpu.reciprocal %32 {approx = true} : vector<8x256xf32> -> vector<8x256xf32>
    %cst_25 = arith.constant 0.000000e+00 : f32
    %34 = vector.broadcast %cst_25 : f32 to vector<8x256xf32>
    %35 = arith.cmpf oge, %26, %34 : vector<8x256xf32>
    %36 = arith.mulf %30, %33 : vector<8x256xf32>
    %37 = arith.select %35, %33, %36 : vector<8x256xi1>, vector<8x256xf32>
    %c0_26 = arith.constant 0 : index
    %c0_27 = arith.constant 0 : index
    %38 = vector.load %arg10[%c0_26, %c0_27] : memref<8x256xf32, #tpu.memory_space<vmem>>, vector<8x256xf32>
    tpu.vector_store %arg10[%c0_26, %c0_27], %37 {strides = array<i32>} : memref<8x256xf32, #tpu.memory_space<vmem>>, vector<8x256xf32>,
    return
  }
  func.func @transform_0(%arg0: i32) -> (i32, i32) {
    %c0_i32 = arith.constant 0 : i32
    %c0_i32_0 = arith.constant 0 : i32
    return %c0_i32, %arg0 : i32, i32
  }
  func.func @transform_1(%arg0: i32) -> (i32, i32) {
    %c0_i32 = arith.constant 0 : i32
    %c0_i32_0 = arith.constant 0 : i32
    %c0_i32_1 = arith.constant 0 : i32
    return %c0_i32, %c0_i32_0 : i32, i32
  }
  func.func @transform_2(%arg0: i32) -> (i32, i32) {
    %c0_i32 = arith.constant 0 : i32
    %c0_i32_0 = arith.constant 0 : i32
    %c0_i32_1 = arith.constant 0 : i32
    return %c0_i32, %c0_i32_0 : i32, i32
  }
  func.func @transform_3(%arg0: i32) -> (i32, i32) {
    %c0_i32 = arith.constant 0 : i32
    %c0_i32_0 = arith.constant 0 : i32
    %c0_i32_1 = arith.constant 0 : i32
    return %c0_i32, %c0_i32_0 : i32, i32
  }
  func.func @transform_4(%arg0: i32) -> (i32, i32) {
    %c0_i32 = arith.constant 0 : i32
    %c0_i32_0 = arith.constant 0 : i32
    %c0_i32_1 = arith.constant 0 : i32
    return %c0_i32, %c0_i32_0 : i32, i32
  }
  func.func @transform_5(%arg0: i32) -> (i32, i32) {
    %c0_i32 = arith.constant 0 : i32
    %c0_i32_0 = arith.constant 0 : i32
    %c0_i32_1 = arith.constant 0 : i32
    return %c0_i32, %c0_i32_0 : i32, i32
  }
  func.func @transform_6(%arg0: i32) -> (i32, i32) {
    %c0_i32 = arith.constant 0 : i32
    %c0_i32_0 = arith.constant 0 : i32
    %c0_i32_1 = arith.constant 0 : i32
    return %c0_i32, %c0_i32_0 : i32, i32
  }
  func.func @transform_7(%arg0: i32) -> (i32, i32) {
    %c0_i32 = arith.constant 0 : i32
    %c0_i32_0 = arith.constant 0 : i32
    %c0_i32_1 = arith.constant 0 : i32
    return %c0_i32, %c0_i32_0 : i32, i32
  }
  func.func @transform_8(%arg0: i32) -> (i32, i32) {
    %c0_i32 = arith.constant 0 : i32
    %c0_i32_0 = arith.constant 0 : i32
    %c0_i32_1 = arith.constant 0 : i32
    return %c0_i32, %c0_i32_0 : i32, i32
  }
  func.func @transform_9(%arg0: i32) -> (i32, i32) {
    %c0_i32 = arith.constant 0 : i32
    %c0_i32_0 = arith.constant 0 : i32
    return %c0_i32, %arg0 : i32, i32
  }
}

</mosaic_0001>

<llo_original>
// kernel: tpu_custom_call.1
$region0: #{tpu_custom_call.1}
  #allocation0 [shape = 'u32[]', space=smem, size = 0x4, offset = 0x4, fixed_abs, tag = 'smem constant byte address 0x4 - core index']
  #allocation1 [shape = 'u32[144,128]{1,0:T(1,128)}', space=vmem, size = 0x12000, scoped, tag = 'internal scratch']
  %s0 = inlined_call_operand.vmem [shape: f32[16,512], index: 0, kind: input, shape index: {}]
  %s1 = inlined_call_operand.vmem [shape: f32[32,16], index: 1, kind: input, shape index: {}]
  %s2 = inlined_call_operand.vmem [shape: f32[32,1], index: 2, kind: input, shape index: {}]
  %s3 = inlined_call_operand.vmem [shape: f32[32,32], index: 3, kind: input, shape index: {}]
  %s4 = inlined_call_operand.vmem [shape: f32[32,1], index: 4, kind: input, shape index: {}]
  %s5 = inlined_call_operand.vmem [shape: f32[32,32], index: 5, kind: input, shape index: {}]
  %s6 = inlined_call_operand.vmem [shape: f32[32,1], index: 6, kind: input, shape index: {}]
  %s7 = inlined_call_operand.vmem [shape: f32[8,32], index: 7, kind: input, shape index: {}]
  %s8 = inlined_call_operand.vmem [shape: f32[8,1], index: 8, kind: input, shape index: {}]
  %s9 = inlined_call_operand.hbm [shape: f32[8,512], index: 9, kind: output, shape index: {}]
  %s10 = sld [smem:[#allocation0]]
  $region92: #{tpu_custom_call.1} parent=0
    _
  %s12 = ssub.s32 1, %s10
  %s13 = scalar_select 0, %s12, %s10
  $region1: #{tpu_custom_call.1} parent=0
    #allocation2 [shape = 'u8[32768]{0}', space=vmem, size = 0x8000, scoped, tag = 'input window, operand 0']
    #allocation3 [shape = 'u8[16384]{0}', space=vmem, size = 0x4000, scoped, tag = 'output window, operand 0']
    #allocation4 [shape = 's32[2]{0}', space=sflag, size = 0x8, scoped, tag = 'scoped memory for tpu_custom_call.1']
    %14 = vsyncpa [#allocation4], 0
    %s15 = scalar_lea.sflag [#allocation4], 1
    %16 = vsyncpa %s15, 0
    loop: start=0, step=1, limit=4
    $region2: #{tpu_custom_call.1} parent=1 // loop_pre_header
      _
    $region3: #{tpu_custom_call.1} parent=1 // loop_header
      %s18 = sphi 0, %s22
      %p19 = scmp.ge.s32.totalorder %s18, 4
      %s28 = sphi 0, %s30
      %s31 = sphi 0, %s28
      %s32 = sphi 0, %s31
      %s48 = sphi 0, %s32
      %s52 = sphi 0, %s52
      %s54 = sphi 0, %s52
      %s55 = sphi 0, %s54
      %s69 = sphi 0, %s55
      %s73 = sphi 0, %s73
      %s75 = sphi 0, %s73
      %s76 = sphi 0, %s75
      %s90 = sphi 0, %s76
      %s94 = sphi 0, %s94
      %s96 = sphi 0, %s94
      %s97 = sphi 0, %s96
      %s111 = sphi 0, %s97
      %s115 = sphi 0, %s115
      %s117 = sphi 0, %s115
      %s118 = sphi 0, %s117
      %s132 = sphi 0, %s118
      %s136 = sphi 0, %s136
      %s138 = sphi 0, %s136
      %s139 = sphi 0, %s138
      %s153 = sphi 0, %s139
      %s157 = sphi 0, %s157
      %s159 = sphi 0, %s157
      %s160 = sphi 0, %s159
      %s174 = sphi 0, %s160
      %s178 = sphi 0, %s178
      %s180 = sphi 0, %s178
      %s181 = sphi 0, %s180
      %s195 = sphi 0, %s181
      %s199 = sphi 0, %s199
      %s201 = sphi 0, %s199
      %s202 = sphi 0, %s201
      %s216 = sphi 0, %s202
      %s222 = sphi 0, %s224
      %s225 = sphi 0, %s222
      %s226 = sphi 0, %s225
      %s242 = sphi 0, %s226
    $region4: #{tpu_custom_call.1} parent=1 // loop_header_branch
      %21 = sbr.rel (%p19) target = $region8
    $region5: #{tpu_custom_call.1} parent=1 // loop_body
      %s23 = ssub.s32 %s18, 1
      %s24 = ssub.s32 %s18, 2
      %s25 = sadd.s32 %s18, 1
      %s26 = ssub.s32 %s18, %s25
      %p27 = scmp.eq.s32.totalorder %s26, 0
      %s29 = sadd.s32 %s28, 1
      %s30 = scalar_select %p27, %s28, %s29
      %p33 = pneg %p27
      %p34 = scmp.eq.s32.totalorder %s18, 1
      %p35 = por %p33, %p34
      %p36 = scmp.ne.s32.totalorder %s28, %s31
      %p37 = scmp.eq.s32.totalorder %s18, 0
      %p38 = por %p36, %p37
      %p39 = scmp.ne.s32.totalorder %s28, %s31
      %p40 = scmp.eq.s32.totalorder %s23, 1
      %p41 = por %p39, %p40
      %p42 = scmp.ne.s32.totalorder %s31, %s32
      %p43 = scmp.eq.s32.totalorder %s23, 0
      %p44 = por %p42, %p43
      %p45 = scmp.ne.s32.totalorder %s31, %s32
      %p46 = scmp.eq.s32.totalorder %s24, 1
      %p47 = por %p45, %p46
      %p49 = scmp.ne.s32.totalorder %s32, %s48
      %p50 = scmp.eq.s32.totalorder %s24, 0
      %p51 = por %p49, %p50
      %s53 = sadd.s32 %s52, 1
      %p56 = scmp.eq.s32.totalorder %s18, 1
      %p57 = scmp.ne.s32.totalorder %s52, %s54
      %p58 = scmp.eq.s32.totalorder %s18, 0
      %p59 = por %p57, %p58
      %p60 = scmp.ne.s32.totalorder %s52, %s54
      %p61 = scmp.eq.s32.totalorder %s23, 1
      %p62 = por %p60, %p61
      %p63 = scmp.ne.s32.totalorder %s54, %s55
      %p64 = scmp.eq.s32.totalorder %s23, 0
      %p65 = por %p63, %p64
      %p66 = scmp.ne.s32.totalorder %s54, %s55
      %p67 = scmp.eq.s32.totalorder %s24, 1
      %p68 = por %p66, %p67
      %p70 = scmp.ne.s32.totalorder %s55, %s69
      %p71 = scmp.eq.s32.totalorder %s24, 0
      %p72 = por %p70, %p71
      %s74 = sadd.s32 %s73, 1
      %p77 = scmp.eq.s32.totalorder %s18, 1
      %p78 = scmp.ne.s32.totalorder %s73, %s75
      %p79 = scmp.eq.s32.totalorder %s18, 0
      %p80 = por %p78, %p79
      %p81 = scmp.ne.s32.totalorder %s73, %s75
      %p82 = scmp.eq.s32.totalorder %s23, 1
      %p83 = por %p81, %p82
      %p84 = scmp.ne.s32.totalorder %s75, %s76
      %p85 = scmp.eq.s32.totalorder %s23, 0
      %p86 = por %p84, %p85
      %p87 = scmp.ne.s32.totalorder %s75, %s76
      %p88 = scmp.eq.s32.totalorder %s24, 1
      %p89 = por %p87, %p88
      %p91 = scmp.ne.s32.totalorder %s76, %s90
      %p92 = scmp.eq.s32.totalorder %s24, 0
      %p93 = por %p91, %p92
      %s95 = sadd.s32 %s94, 1
      %p98 = scmp.eq.s32.totalorder %s18, 1
      %p99 = scmp.ne.s32.totalorder %s94, %s96
      %p100 = scmp.eq.s32.totalorder %s18, 0
      %p101 = por %p99, %p100
      %p102 = scmp.ne.s32.totalorder %s94, %s96
      %p103 = scmp.eq.s32.totalorder %s23, 1
      %p104 = por %p102, %p103
      %p105 = scmp.ne.s32.totalorder %s96, %s97
      %p106 = scmp.eq.s32.totalorder %s23, 0
      %p107 = por %p105, %p106
      %p108 = scmp.ne.s32.totalorder %s96, %s97
      %p109 = scmp.eq.s32.totalorder %s24, 1
      %p110 = por %p108, %p109
      %p112 = scmp.ne.s32.totalorder %s97, %s111
      %p113 = scmp.eq.s32.totalorder %s24, 0
      %p114 = por %p112, %p113
      %s116 = sadd.s32 %s115, 1
      %p119 = scmp.eq.s32.totalorder %s18, 1
      %p120 = scmp.ne.s32.totalorder %s115, %s117
      %p121 = scmp.eq.s32.totalorder %s18, 0
      %p122 = por %p120, %p121
      %p123 = scmp.ne.s32.totalorder %s115, %s117
      %p124 = scmp.eq.s32.totalorder %s23, 1
      %p125 = por %p123, %p124
      %p126 = scmp.ne.s32.totalorder %s117, %s118
      %p127 = scmp.eq.s32.totalorder %s23, 0
      %p128 = por %p126, %p127
      %p129 = scmp.ne.s32.totalorder %s117, %s118
      %p130 = scmp.eq.s32.totalorder %s24, 1
      %p131 = por %p129, %p130
      %p133 = scmp.ne.s32.totalorder %s118, %s132
      %p134 = scmp.eq.s32.totalorder %s24, 0
      %p135 = por %p133, %p134
      %s137 = sadd.s32 %s136, 1
      %p140 = scmp.eq.s32.totalorder %s18, 1
      %p141 = scmp.ne.s32.totalorder %s136, %s138
      %p142 = scmp.eq.s32.totalorder %s18, 0
      %p143 = por %p141, %p142
      %p144 = scmp.ne.s32.totalorder %s136, %s138
      %p145 = scmp.eq.s32.totalorder %s23, 1
      %p146 = por %p144, %p145
      %p147 = scmp.ne.s32.totalorder %s138, %s139
      %p148 = scmp.eq.s32.totalorder %s23, 0
      %p149 = por %p147, %p148
      %p150 = scmp.ne.s32.totalorder %s138, %s139
      %p151 = scmp.eq.s32.totalorder %s24, 1
      %p152 = por %p150, %p151
      %p154 = scmp.ne.s32.totalorder %s139, %s153
      %p155 = scmp.eq.s32.totalorder %s24, 0
      %p156 = por %p154, %p155
      %s158 = sadd.s32 %s157, 1
      %p161 = scmp.eq.s32.totalorder %s18, 1
      %p162 = scmp.ne.s32.totalorder %s157, %s159
      %p163 = scmp.eq.s32.totalorder %s18, 0
      %p164 = por %p162, %p163
      %p165 = scmp.ne.s32.totalorder %s157, %s159
      %p166 = scmp.eq.s32.totalorder %s23, 1
      %p167 = por %p165, %p166
      %p168 = scmp.ne.s32.totalorder %s159, %s160
      %p169 = scmp.eq.s32.totalorder %s23, 0
      %p170 = por %p168, %p169
      %p171 = scmp.ne.s32.totalorder %s159, %s160
      %p172 = scmp.eq.s32.totalorder %s24, 1
      %p173 = por %p171, %p172
      %p175 = scmp.ne.s32.totalorder %s160, %s174
      %p176 = scmp.eq.s32.totalorder %s24, 0
      %p177 = por %p175, %p176
      %s179 = sadd.s32 %s178, 1
      %p182 = scmp.eq.s32.totalorder %s18, 1
      %p183 = scmp.ne.s32.totalorder %s178, %s180
      %p184 = scmp.eq.s32.totalorder %s18, 0
      %p185 = por %p183, %p184
      %p186 = scmp.ne.s32.totalorder %s178, %s180
      %p187 = scmp.eq.s32.totalorder %s23, 1
      %p188 = por %p186, %p187
      %p189 = scmp.ne.s32.totalorder %s180, %s181
      %p190 = scmp.eq.s32.totalorder %s23, 0
      %p191 = por %p189, %p190
      %p192 = scmp.ne.s32.totalorder %s180, %s181
      %p193 = scmp.eq.s32.totalorder %s24, 1
      %p194 = por %p192, %p193
      %p196 = scmp.ne.s32.totalorder %s181, %s195
      %p197 = scmp.eq.s32.totalorder %s24, 0
      %p198 = por %p196, %p197
      %s200 = sadd.s32 %s199, 1
      %p203 = scmp.eq.s32.totalorder %s18, 1
      %p204 = scmp.ne.s32.totalorder %s199, %s201
      %p205 = scmp.eq.s32.totalorder %s18, 0
      %p206 = por %p204, %p205
      %p207 = scmp.ne.s32.totalorder %s199, %s201
      %p208 = scmp.eq.s32.totalorder %s23, 1
      %p209 = por %p207, %p208
      %p210 = scmp.ne.s32.totalorder %s201, %s202
      %p211 = scmp.eq.s32.totalorder %s23, 0
      %p212 = por %p210, %p211
      %p213 = scmp.ne.s32.totalorder %s201, %s202
      %p214 = scmp.eq.s32.totalorder %s24, 1
      %p215 = por %p213, %p214
      %p217 = scmp.ne.s32.totalorder %s202, %s216
      %p218 = scmp.eq.s32.totalorder %s24, 0
      %p219 = por %p217, %p218
      %s220 = ssub.s32 %s18, %s25
      %p221 = scmp.eq.s32.totalorder %s220, 0
      %s223 = sadd.s32 %s222, 1
      %s224 = scalar_select %p221, %s222, %s223
      %p227 = pneg %p221
      %p228 = scmp.eq.s32.totalorder %s18, 1
      %p229 = por %p227, %p228
      %p230 = scmp.ne.s32.totalorder %s222, %s225
      %p231 = scmp.eq.s32.totalorder %s18, 0
      %p232 = por %p230, %p231
      %p233 = scmp.ne.s32.totalorder %s222, %s225
      %p234 = scmp.eq.s32.totalorder %s23, 1
      %p235 = por %p233, %p234
      %p236 = scmp.ne.s32.totalorder %s225, %s226
      %p237 = scmp.eq.s32.totalorder %s23, 0
      %p238 = por %p236, %p237
      %p239 = scmp.ne.s32.totalorder %s225, %s226
      %p240 = scmp.eq.s32.totalorder %s24, 1
      %p241 = por %p239, %p240
      %p243 = scmp.ne.s32.totalorder %s226, %s242
      %p244 = scmp.eq.s32.totalorder %s24, 0
      %p245 = por %p243, %p244
      %p246 = scmp.le.s32.totalorder 1, %s18
      %p247 = scmp.lt.s32.totalorder %s18, 3
      %p248 = pnand %p246, %p247
      %p249 = pneg %p248
      // Predicated region
      $region9: #{tpu_custom_call.1} parent=5 // pred_check
        _
      $region10: #{tpu_custom_call.1} parent=5 // pred_check_branch
        %251 = sbr.rel (%p248) target = $region12
      $region11: #{tpu_custom_call.1} parent=5 // pred_region
        %s252 = ssub.s32 %s18, 1
        // Predicated region
        $region13: #{tpu_custom_call.1} parent=11 // pred_check
          %p253 = pneg %p65
        $region14: #{tpu_custom_call.1} parent=11 // pred_check_branch
          %255 = sbr.rel (%p253) target = $region16
        $region15: #{tpu_custom_call.1} parent=11 // pred_region
          _
        $region16: #{tpu_custom_call.1} parent=11 // pred_fallthru
          _
        // Predicated region
        $region17: #{tpu_custom_call.1} parent=11 // pred_check
          %p256 = pneg %p86
        $region18: #{tpu_custom_call.1} parent=11 // pred_check_branch
          %258 = sbr.rel (%p256) target = $region20
        $region19: #{tpu_custom_call.1} parent=11 // pred_region
          _
        $region20: #{tpu_custom_call.1} parent=11 // pred_fallthru
          _
        // Predicated region
        $region21: #{tpu_custom_call.1} parent=11 // pred_check
          %p259 = pneg %p107
        $region22: #{tpu_custom_call.1} parent=11 // pred_check_branch
          %261 = sbr.rel (%p259) target = $region24
        $region23: #{tpu_custom_call.1} parent=11 // pred_region
          _
        $region24: #{tpu_custom_call.1} parent=11 // pred_fallthru
          _
        // Predicated region
        $region25: #{tpu_custom_call.1} parent=11 // pred_check
          %p262 = pneg %p128
        $region26: #{tpu_custom_call.1} parent=11 // pred_check_branch
          %264 = sbr.rel (%p262) target = $region28
        $region27: #{tpu_custom_call.1} parent=11 // pred_region
          _
        $region28: #{tpu_custom_call.1} parent=11 // pred_fallthru
          _
        // Predicated region
        $region29: #{tpu_custom_call.1} parent=11 // pred_check
          %p265 = pneg %p149
        $region30: #{tpu_custom_call.1} parent=11 // pred_check_branch
          %267 = sbr.rel (%p265) target = $region32
        $region31: #{tpu_custom_call.1} parent=11 // pred_region
          _
        $region32: #{tpu_custom_call.1} parent=11 // pred_fallthru
          _
        // Predicated region
        $region33: #{tpu_custom_call.1} parent=11 // pred_check
          %p268 = pneg %p170
        $region34: #{tpu_custom_call.1} parent=11 // pred_check_branch
          %270 = sbr.rel (%p268) target = $region36
        $region35: #{tpu_custom_call.1} parent=11 // pred_region
          _
        $region36: #{tpu_custom_call.1} parent=11 // pred_fallthru
          _
        // Predicated region
        $region37: #{tpu_custom_call.1} parent=11 // pred_check
          %p271 = pneg %p191
        $region38: #{tpu_custom_call.1} parent=11 // pred_check_branch
          %273 = sbr.rel (%p271) target = $region40
        $region39: #{tpu_custom_call.1} parent=11 // pred_region
          _
        $region40: #{tpu_custom_call.1} parent=11 // pred_fallthru
          _
        // Predicated region
        $region41: #{tpu_custom_call.1} parent=11 // pred_check
          %p274 = pneg %p212
        $region42: #{tpu_custom_call.1} parent=11 // pred_check_branch
          %276 = sbr.rel (%p274) target = $region44
        $region43: #{tpu_custom_call.1} parent=11 // pred_region
          _
        $region44: #{tpu_custom_call.1} parent=11 // pred_fallthru
          _
      $region12: #{tpu_custom_call.1} parent=5 // pred_fallthru
        _
      %p277 = scmp.lt.s32.totalorder %s18, 2
      // Predicated region
      $region45: #{tpu_custom_call.1} parent=5 // pred_check
        %p278 = pneg %p277
      $region46: #{tpu_custom_call.1} parent=5 // pred_check_branch
        %280 = sbr.rel (%p278) target = $region48
      $region47: #{tpu_custom_call.1} parent=5 // pred_region
        // Predicated region
        $region49: #{tpu_custom_call.1} parent=47 // pred_check
          %p281 = pneg %p38
        $region50: #{tpu_custom_call.1} parent=47 // pred_check_branch
          %283 = sbr.rel (%p281) target = $region52
        $region51: #{tpu_custom_call.1} parent=47 // pred_region
          %s284 = sand.u32 %s28, 1
          %s285 = sand.u32 %s28, 1
          %s286 = smul.addr %s285, 32
          %s287 = scalar_lea.vmem [#allocation2], %s286
          %s288 = smul.u32 2, %s18
          %s289 = smul.addr %s288, 8
          %s290 = scalar_lea.vmem %s0, %s289
          // Predicated region
          $region53: #{tpu_custom_call.1} parent=51 // pred_check
            _
          $region54: #{tpu_custom_call.1} parent=51 // pred_check_branch
            %292 = sbr.rel (0) target = $region56
          $region55: #{tpu_custom_call.1} parent=51 // pred_region
            // Predicated region
            $region57: #{tpu_custom_call.1} parent=55 // pred_check
              _
            $region58: #{tpu_custom_call.1} parent=55 // pred_check_branch
              %294 = sbr.rel (0) target = $region60
            $region59: #{tpu_custom_call.1} parent=55 // pred_region
              loop: start=0, step=1, limit=1
              $region61: #{tpu_custom_call.1} parent=59 // loop_pre_header
                _
              $region62: #{tpu_custom_call.1} parent=59 // loop_header
                %s296 = sphi 0, %s300
                %p297 = scmp.ge.s32.totalorder %s296, 1
                %s301 = sphi %s290, %s290
                %s302 = sphi %s287, %s287
              $region63: #{tpu_custom_call.1} parent=59 // loop_header_branch
                %299 = sbr.rel (%p297) target = $region67
              $region64: #{tpu_custom_call.1} parent=59 // loop_body
                %v303 = vld [vmem:[%s301] sm:$0xff]
                %304 = vst [vmem:[%s302] sm:$0xff] %v303
                %v305 = vld [vmem:[%s301 + $0x8] sm:$0xff]
                %306 = vst [vmem:[%s302 + $0x8] sm:$0xff] %v305
                %v307 = vld [vmem:[%s301 + $0x20] sm:$0xff]
                %308 = vst [vmem:[%s302 + $0x10] sm:$0xff] %v307
                %v309 = vld [vmem:[%s301 + $0x28] sm:$0xff]
                %310 = vst [vmem:[%s302 + $0x18] sm:$0xff] %v309
              $region65: #{tpu_custom_call.1} parent=59 // loop_footer
                %s300 = sadd.s32 1, %s296
              $region66: #{tpu_custom_call.1} parent=59 // loop_footer_branch
                %295 = sbr.rel target = $region62
              $region67: #{tpu_custom_call.1} parent=59 // loop_exit
                _
            $region60: #{tpu_custom_call.1} parent=55 // pred_fallthru
              _
            // Predicated region
            $region68: #{tpu_custom_call.1} parent=55 // pred_check
              _
            $region69: #{tpu_custom_call.1} parent=55 // pred_check_branch
              %312 = sbr.rel target = $region71
            $region70: #{tpu_custom_call.1} parent=55 // pred_region
              _
            $region71: #{tpu_custom_call.1} parent=55 // pred_fallthru
              _
          $region56: #{tpu_custom_call.1} parent=51 // pred_fallthru
            _
          %313 = vnop
        $region52: #{tpu_custom_call.1} parent=47 // pred_fallthru
          _
      $region48: #{tpu_custom_call.1} parent=5 // pred_fallthru
        _
      %p314 = scmp.le.s32.totalorder 1, %s18
      %p315 = scmp.lt.s32.totalorder %s18, 3
      %p316 = pnand %p314, %p315
      %p317 = pneg %p316
      // Predicated region
      $region72: #{tpu_custom_call.1} parent=5 // pred_check
        _
      $region73: #{tpu_custom_call.1} parent=5 // pred_check_branch
        %319 = sbr.rel (%p316) target = $region75
      $region74: #{tpu_custom_call.1} parent=5 // pred_region
        %s320 = ssub.s32 %s18, 1
        %s321 = sand.u32 %s31, 1
        %s322 = sand.u32 %s31, 1
        %s323 = smul.addr %s322, 32
        %s324 = scalar_lea.vmem [#allocation2], %s323
        // Predicated region
        $region76: #{tpu_custom_call.1} parent=74 // pred_check
          %p325 = pneg %p44
        $region77: #{tpu_custom_call.1} parent=74 // pred_check_branch
          %327 = sbr.rel (%p325) target = $region79
        $region78: #{tpu_custom_call.1} parent=74 // pred_region
          _
        $region79: #{tpu_custom_call.1} parent=74 // pred_fallthru
          _
        %s328 = sand.u32 %s31, 1
        %s329 = sand.u32 %s31, 1
        %s330 = smul.addr %s329, 32
        %s331 = scalar_lea.vmem [#allocation2], %s330
        %p332 = pneg %p44
        %p333 = pneg %p41
        %p334 = pneg %p65
        %p335 = pneg %p62
        %p336 = pneg %p86
        %p337 = pneg %p83
        %p338 = pneg %p107
        %p339 = pneg %p104
        %p340 = pneg %p128
        %p341 = pneg %p125
        %p342 = pneg %p149
        %p343 = pneg %p146
        %p344 = pneg %p170
        %p345 = pneg %p167
        %p346 = pneg %p191
        %p347 = pneg %p188
        %p348 = pneg %p212
        %p349 = pneg %p209
        %p350 = pneg %p238
        %p351 = pneg %p235
        %s352 = sand.u32 %s225, 1
        %s353 = scalar_lea.sflag [#allocation4], %s352
        %s354 = sand.u32 %s225, 1
        %s355 = smul.addr %s354, 16
        %s356 = scalar_lea.vmem [#allocation3], %s355
        %s357 = smul.u32 2, %s23
        %s358 = smul.u32 2, %s23
        %v359 = vld [vmem:[%s324] sm:$0xff]
        %v360 = vld [vmem:[%s324 + $0x8] sm:$0xff]
        %v361 = vld [vmem:[%s324 + $0x10] sm:$0xff]
        %v362 = vld [vmem:[%s324 + $0x18] sm:$0xff]
        %v363 = vld [vmem:[%s1] sm:$0xff]
        %v364 = vld [vmem:[%s1 + $0x8] sm:$0xff]
        %v365 = vld [vmem:[%s1 + $0x10] sm:$0xff]
        %v366 = vld [vmem:[%s1 + $0x18] sm:$0xff]
        %v367 = vld [vmem:[%s2] sm:$0xff]
        %v368 = vld [vmem:[%s2 + $0x8] sm:$0xff]
        %v369 = vld [vmem:[%s2 + $0x10] sm:$0xff]
        %v370 = vld [vmem:[%s2 + $0x18] sm:$0xff]
        %372 = vset.pattern.permute.xlu0 0
        %373 = vperm.xlu0 %372, %v367
        %v374 = vpop.permute.xlu0 %373
        %377 = vset.pattern.permute.xlu0 0
        %378 = vperm.xlu0 %377, %v368
        %v379 = vpop.permute.xlu0 %378
        %382 = vset.pattern.permute.xlu0 0
        %383 = vperm.xlu0 %382, %v369
        %v384 = vpop.permute.xlu0 %383
        %387 = vset.pattern.permute.xlu0 0
        %388 = vperm.xlu0 %387, %v370
        %v389 = vpop.permute.xlu0 %388
        %vm391 = vcmask 130048
        %v393 = vsel %vm391, %v363, 0
        %v396 = vsel %vm391, %v364, 0
        %v399 = vsel %vm391, %v365, 0
        %v402 = vsel %vm391, %v366, 0
        %404 = vmatprep.subr.mxu0 %v360
        %405 = vmatpush1.msra.mxu0 %v359
        %406 = vmatprep.subr.mxu0 %v362
        %407 = vmatpush1.msra.mxu0 %v361
        %408 = vmatprep.subr.mxu0 0.0
        %409 = vmatpush1.msra.mxu0 0.0
        %410 = vmatprep.subr.mxu0 0.0
        %411 = vmatpush1.msra.mxu0 0.0
        %412 = vmatprep.subr.mxu0 0.0
        %413 = vmatpush1.msra.mxu0 0.0
        %414 = vmatprep.subr.mxu0 0.0
        %415 = vmatpush1.msra.mxu0 0.0
        %416 = vmatprep.subr.mxu0 0.0
        %417 = vmatpush1.msra.mxu0 0.0
        %418 = vmatprep.subr.mxu0 0.0
        %419 = vmatpush1.msra.mxu0 0.0
        %420 = vmatprep.subr.mxu0 0.0
        %421 = vmatpush1.msra.mxu0 0.0
        %422 = vmatprep.subr.mxu0 0.0
        %423 = vmatpush1.msra.mxu0 0.0
        %424 = vmatprep.subr.mxu0 0.0
        %425 = vmatpush1.msra.mxu0 0.0
        %426 = vmatprep.subr.mxu0 0.0
        %427 = vmatpush1.msra.mxu0 0.0
        %428 = vmatprep.subr.mxu0 0.0
        %429 = vmatpush1.msra.mxu0 0.0
        %430 = vmatprep.subr.mxu0 0.0
        %431 = vmatpush1.msra.mxu0 0.0
        %432 = vmatprep.subr.mxu0 0.0
        %433 = vmatpush1.msra.mxu0 0.0
        %434 = vmatprep.subr.mxu0 0.0
        %435 = vmatpush1.msra.mxu0 0.0
        %436 = vmatprep.subr.mxu0 0.0
        %437 = vmatpush1.msra.mxu0 0.0
        %438 = vmatprep.subr.mxu0 0.0
        %439 = vmatpush1.msra.mxu0 0.0
        %440 = vmatprep.subr.mxu0 0.0
        %441 = vmatpush1.msra.mxu0 0.0
        %442 = vmatprep.subr.mxu0 0.0
        %443 = vmatpush1.msra.mxu0 0.0
        %444 = vmatprep.subr.mxu0 0.0
        %445 = vmatpush1.msra.mxu0 0.0
        %446 = vmatprep.subr.mxu0 0.0
        %447 = vmatpush1.msra.mxu0 0.0
        %448 = vmatprep.subr.mxu0 0.0
        %449 = vmatpush1.msra.mxu0 0.0
        %450 = vmatprep.subr.mxu0 0.0
        %451 = vmatpush1.msra.mxu0 0.0
        %452 = vmatprep.subr.mxu0 0.0
        %453 = vmatpush1.msra.mxu0 0.0
        %454 = vmatprep.subr.mxu0 0.0
        %455 = vmatpush1.msra.mxu0 0.0
        %456 = vmatprep.subr.mxu0 0.0
        %457 = vmatpush1.msra.mxu0 0.0
        %458 = vmatprep.subr.mxu0 0.0
        %459 = vmatpush1.msra.mxu0 0.0
        %460 = vmatprep.subr.mxu0 0.0
        %461 = vmatpush1.msra.mxu0 0.0
        %462 = vmatprep.subr.mxu0 0.0
        %463 = vmatpush1.msra.mxu0 0.0
        %464 = vmatprep.subr.mxu0 0.0
        %465 = vmatpush1.msra.mxu0 0.0
        %466 = vmatprep.subr.mxu0 0.0
        %467 = vmatpush1.msra.mxu0 0.0
        %468 = vmatprep.mubr.f32.mxu0 0.0
        %469 = vmatmul.mubr.f32.gmra.mrb[0].mxu0 %v393
        %v470 = vpop.f32.mrb[0].mxu0
        %v471 = vadd.f32 %v374, %v470
        %v472 = vpop.f32.mrb[0].mxu0
        %v473 = vadd.f32 %v374, %v472
        %474 = vmatprep.mubr.f32.mxu0 0.0
        %475 = vmatmul.mubr.f32.gmra.mrb[0].mxu0 %v396
        %v476 = vpop.f32.mrb[0].mxu0
        %v477 = vadd.f32 %v379, %v476
        %v478 = vpop.f32.mrb[0].mxu0
        %v479 = vadd.f32 %v379, %v478
        %480 = vmatprep.mubr.f32.mxu0 0.0
        %481 = vmatmul.mubr.f32.gmra.mrb[0].mxu0 %v399
        %v482 = vpop.f32.mrb[0].mxu0
        %v483 = vadd.f32 %v384, %v482
        %v484 = vpop.f32.mrb[0].mxu0
        %v485 = vadd.f32 %v384, %v484
        %486 = vmatprep.mubr.f32.mxu0 0.0
        %487 = vmatmul.mubr.f32.gmra.mrb[0].mxu0 %v402
        %v488 = vpop.f32.mrb[0].mxu0
        %v489 = vadd.f32 %v389, %v488
        %v490 = vpop.f32.mrb[0].mxu0
        %v491 = vadd.f32 %v389, %v490
        %492 = vdwg.mxu0
        %v493 = vmax.f32 %v471, 0.0
        %v494 = vmax.f32 %v473, 0.0
        %v495 = vmax.f32 %v477, 0.0
        %v496 = vmax.f32 %v479, 0.0
        %v497 = vmax.f32 %v483, 0.0
        %v498 = vmax.f32 %v485, 0.0
        %v499 = vmax.f32 %v489, 0.0
        %v500 = vmax.f32 %v491, 0.0
        %v501 = vld [vmem:[%s3] sm:$0xff]
        %v502 = vld [vmem:[%s3 + $0x8] sm:$0xff]
        %v503 = vld [vmem:[%s3 + $0x10] sm:$0xff]
        %v504 = vld [vmem:[%s3 + $0x18] sm:$0xff]
        %v505 = vld [vmem:[%s4] sm:$0xff]
        %v506 = vld [vmem:[%s4 + $0x8] sm:$0xff]
        %v507 = vld [vmem:[%s4 + $0x10] sm:$0xff]
        %v508 = vld [vmem:[%s4 + $0x18] sm:$0xff]
        %510 = vset.pattern.permute.xlu0 0
        %511 = vperm.xlu0 %510, %v505
        %v512 = vpop.permute.xlu0 %511
        %515 = vset.pattern.permute.xlu0 0
        %516 = vperm.xlu0 %515, %v506
        %v517 = vpop.permute.xlu0 %516
        %520 = vset.pattern.permute.xlu0 0
        %521 = vperm.xlu0 %520, %v507
        %v522 = vpop.permute.xlu0 %521
        %525 = vset.pattern.permute.xlu0 0
        %526 = vperm.xlu0 %525, %v508
        %v527 = vpop.permute.xlu0 %526
        %vm529 = vcmask 261120
        %v531 = vsel %vm529, %v501, 0
        %v534 = vsel %vm529, %v502, 0
        %v537 = vsel %vm529, %v503, 0
        %v540 = vsel %vm529, %v504, 0
        %542 = vmatprep.subr.mxu0 %v494
        %543 = vmatpush1.msra.mxu0 %v493
        %544 = vmatprep.subr.mxu0 %v496
        %545 = vmatpush1.msra.mxu0 %v495
        %546 = vmatprep.subr.mxu0 %v498
        %547 = vmatpush1.msra.mxu0 %v497
        %548 = vmatprep.subr.mxu0 %v500
        %549 = vmatpush1.msra.mxu0 %v499
        %550 = vmatprep.subr.mxu0 0.0
        %551 = vmatpush1.msra.mxu0 0.0
        %552 = vmatprep.subr.mxu0 0.0
        %553 = vmatpush1.msra.mxu0 0.0
        %554 = vmatprep.subr.mxu0 0.0
        %555 = vmatpush1.msra.mxu0 0.0
        %556 = vmatprep.subr.mxu0 0.0
        %557 = vmatpush1.msra.mxu0 0.0
        %558 = vmatprep.subr.mxu0 0.0
        %559 = vmatpush1.msra.mxu0 0.0
        %560 = vmatprep.subr.mxu0 0.0
        %561 = vmatpush1.msra.mxu0 0.0
        %562 = vmatprep.subr.mxu0 0.0
        %563 = vmatpush1.msra.mxu0 0.0
        %564 = vmatprep.subr.mxu0 0.0
        %565 = vmatpush1.msra.mxu0 0.0
        %566 = vmatprep.subr.mxu0 0.0
        %567 = vmatpush1.msra.mxu0 0.0
        %568 = vmatprep.subr.mxu0 0.0
        %569 = vmatpush1.msra.mxu0 0.0
        %570 = vmatprep.subr.mxu0 0.0
        %571 = vmatpush1.msra.mxu0 0.0
        %572 = vmatprep.subr.mxu0 0.0
        %573 = vmatpush1.msra.mxu0 0.0
        %574 = vmatprep.subr.mxu0 0.0
        %575 = vmatpush1.msra.mxu0 0.0
        %576 = vmatprep.subr.mxu0 0.0
        %577 = vmatpush1.msra.mxu0 0.0
        %578 = vmatprep.subr.mxu0 0.0
        %579 = vmatpush1.msra.mxu0 0.0
        %580 = vmatprep.subr.mxu0 0.0
        %581 = vmatpush1.msra.mxu0 0.0
        %582 = vmatprep.subr.mxu0 0.0
        %583 = vmatpush1.msra.mxu0 0.0
        %584 = vmatprep.subr.mxu0 0.0
        %585 = vmatpush1.msra.mxu0 0.0
        %586 = vmatprep.subr.mxu0 0.0
        %587 = vmatpush1.msra.mxu0 0.0
        %588 = vmatprep.subr.mxu0 0.0
        %589 = vmatpush1.msra.mxu0 0.0
        %590 = vmatprep.subr.mxu0 0.0
        %591 = vmatpush1.msra.mxu0 0.0
        %592 = vmatprep.subr.mxu0 0.0
        %593 = vmatpush1.msra.mxu0 0.0
        %594 = vmatprep.subr.mxu0 0.0
        %595 = vmatpush1.msra.mxu0 0.0
        %596 = vmatprep.subr.mxu0 0.0
        %597 = vmatpush1.msra.mxu0 0.0
        %598 = vmatprep.subr.mxu0 0.0
        %599 = vmatpush1.msra.mxu0 0.0
        %600 = vmatprep.subr.mxu0 0.0
        %601 = vmatpush1.msra.mxu0 0.0
        %602 = vmatprep.subr.mxu0 0.0
        %603 = vmatpush1.msra.mxu0 0.0
        %604 = vmatprep.subr.mxu0 0.0
        %605 = vmatpush1.msra.mxu0 0.0
        %606 = vmatprep.mubr.f32.mxu0 0.0
        %607 = vmatmul.mubr.f32.gmra.mrb[0].mxu0 %v531
        %v608 = vpop.f32.mrb[0].mxu0
        %v609 = vadd.f32 %v512, %v608
        %v610 = vpop.f32.mrb[0].mxu0
        %v611 = vadd.f32 %v512, %v610
        %612 = vmatprep.mubr.f32.mxu0 0.0
        %613 = vmatmul.mubr.f32.gmra.mrb[0].mxu0 %v534
        %v614 = vpop.f32.mrb[0].mxu0
        %v615 = vadd.f32 %v517, %v614
        %v616 = vpop.f32.mrb[0].mxu0
        %v617 = vadd.f32 %v517, %v616
        %618 = vmatprep.mubr.f32.mxu0 0.0
        %619 = vmatmul.mubr.f32.gmra.mrb[0].mxu0 %v537
        %v620 = vpop.f32.mrb[0].mxu0
        %v621 = vadd.f32 %v522, %v620
        %v622 = vpop.f32.mrb[0].mxu0
        %v623 = vadd.f32 %v522, %v622
        %624 = vmatprep.mubr.f32.mxu0 0.0
        %625 = vmatmul.mubr.f32.gmra.mrb[0].mxu0 %v540
        %v626 = vpop.f32.mrb[0].mxu0
        %v627 = vadd.f32 %v527, %v626
        %v628 = vpop.f32.mrb[0].mxu0
        %v629 = vadd.f32 %v527, %v628
        %630 = vdwg.mxu0
        %v631 = vmax.f32 %v609, 0.0
        %v632 = vmax.f32 %v611, 0.0
        %v633 = vmax.f32 %v615, 0.0
        %v634 = vmax.f32 %v617, 0.0
        %v635 = vmax.f32 %v621, 0.0
        %v636 = vmax.f32 %v623, 0.0
        %v637 = vmax.f32 %v627, 0.0
        %v638 = vmax.f32 %v629, 0.0
        %v639 = vld [vmem:[%s5] sm:$0xff]
        %v640 = vld [vmem:[%s5 + $0x8] sm:$0xff]
        %v641 = vld [vmem:[%s5 + $0x10] sm:$0xff]
        %v642 = vld [vmem:[%s5 + $0x18] sm:$0xff]
        %v643 = vld [vmem:[%s6] sm:$0xff]
        %v644 = vld [vmem:[%s6 + $0x8] sm:$0xff]
        %v645 = vld [vmem:[%s6 + $0x10] sm:$0xff]
        %v646 = vld [vmem:[%s6 + $0x18] sm:$0xff]
        %648 = vset.pattern.permute.xlu0 0
        %649 = vperm.xlu0 %648, %v643
        %v650 = vpop.permute.xlu0 %649
        %653 = vset.pattern.permute.xlu0 0
        %654 = vperm.xlu0 %653, %v644
        %v655 = vpop.permute.xlu0 %654
        %658 = vset.pattern.permute.xlu0 0
        %659 = vperm.xlu0 %658, %v645
        %v660 = vpop.permute.xlu0 %659
        %663 = vset.pattern.permute.xlu0 0
        %664 = vperm.xlu0 %663, %v646
        %v665 = vpop.permute.xlu0 %664
        %v668 = vsel %vm529, %v639, 0
        %v671 = vsel %vm529, %v640, 0
        %v674 = vsel %vm529, %v641, 0
        %v677 = vsel %vm529, %v642, 0
        %679 = vmatprep.subr.mxu0 %v632
        %680 = vmatpush1.msra.mxu0 %v631
        %681 = vmatprep.subr.mxu0 %v634
        %682 = vmatpush1.msra.mxu0 %v633
        %683 = vmatprep.subr.mxu0 %v636
        %684 = vmatpush1.msra.mxu0 %v635
        %685 = vmatprep.subr.mxu0 %v638
        %686 = vmatpush1.msra.mxu0 %v637
        %687 = vmatprep.subr.mxu0 0.0
        %688 = vmatpush1.msra.mxu0 0.0
        %689 = vmatprep.subr.mxu0 0.0
        %690 = vmatpush1.msra.mxu0 0.0
        %691 = vmatprep.subr.mxu0 0.0
        %692 = vmatpush1.msra.mxu0 0.0
        %693 = vmatprep.subr.mxu0 0.0
        %694 = vmatpush1.msra.mxu0 0.0
        %695 = vmatprep.subr.mxu0 0.0
        %696 = vmatpush1.msra.mxu0 0.0
        %697 = vmatprep.subr.mxu0 0.0
        %698 = vmatpush1.msra.mxu0 0.0
        %699 = vmatprep.subr.mxu0 0.0
        %700 = vmatpush1.msra.mxu0 0.0
        %701 = vmatprep.subr.mxu0 0.0
        %702 = vmatpush1.msra.mxu0 0.0
        %703 = vmatprep.subr.mxu0 0.0
        %704 = vmatpush1.msra.mxu0 0.0
        %705 = vmatprep.subr.mxu0 0.0
        %706 = vmatpush1.msra.mxu0 0.0
        %707 = vmatprep.subr.mxu0 0.0
        %708 = vmatpush1.msra.mxu0 0.0
        %709 = vmatprep.subr.mxu0 0.0
        %710 = vmatpush1.msra.mxu0 0.0
        %711 = vmatprep.subr.mxu0 0.0
        %712 = vmatpush1.msra.mxu0 0.0
        %713 = vmatprep.subr.mxu0 0.0
        %714 = vmatpush1.msra.mxu0 0.0
        %715 = vmatprep.subr.mxu0 0.0
        %716 = vmatpush1.msra.mxu0 0.0
        %717 = vmatprep.subr.mxu0 0.0
        %718 = vmatpush1.msra.mxu0 0.0
        %719 = vmatprep.subr.mxu0 0.0
        %720 = vmatpush1.msra.mxu0 0.0
        %721 = vmatprep.subr.mxu0 0.0
        %722 = vmatpush1.msra.mxu0 0.0
        %723 = vmatprep.subr.mxu0 0.0
        %724 = vmatpush1.msra.mxu0 0.0
        %725 = vmatprep.subr.mxu0 0.0
        %726 = vmatpush1.msra.mxu0 0.0
        %727 = vmatprep.subr.mxu0 0.0
        %728 = vmatpush1.msra.mxu0 0.0
        %729 = vmatprep.subr.mxu0 0.0
        %730 = vmatpush1.msra.mxu0 0.0
        %731 = vmatprep.subr.mxu0 0.0
        %732 = vmatpush1.msra.mxu0 0.0
        %733 = vmatprep.subr.mxu0 0.0
        %734 = vmatpush1.msra.mxu0 0.0
        %735 = vmatprep.subr.mxu0 0.0
        %736 = vmatpush1.msra.mxu0 0.0
        %737 = vmatprep.subr.mxu0 0.0
        %738 = vmatpush1.msra.mxu0 0.0
        %739 = vmatprep.subr.mxu0 0.0
        %740 = vmatpush1.msra.mxu0 0.0
        %741 = vmatprep.subr.mxu0 0.0
        %742 = vmatpush1.msra.mxu0 0.0
        %743 = vmatprep.mubr.f32.mxu0 0.0
        %744 = vmatmul.mubr.f32.gmra.mrb[0].mxu0 %v668
        %v745 = vpop.f32.mrb[0].mxu0
        %v746 = vadd.f32 %v650, %v745
        %v747 = vpop.f32.mrb[0].mxu0
        %v748 = vadd.f32 %v650, %v747
        %749 = vmatprep.mubr.f32.mxu0 0.0
        %750 = vmatmul.mubr.f32.gmra.mrb[0].mxu0 %v671
        %v751 = vpop.f32.mrb[0].mxu0
        %v752 = vadd.f32 %v655, %v751
        %v753 = vpop.f32.mrb[0].mxu0
        %v754 = vadd.f32 %v655, %v753
        %755 = vmatprep.mubr.f32.mxu0 0.0
        %756 = vmatmul.mubr.f32.gmra.mrb[0].mxu0 %v674
        %v757 = vpop.f32.mrb[0].mxu0
        %v758 = vadd.f32 %v660, %v757
        %v759 = vpop.f32.mrb[0].mxu0
        %v760 = vadd.f32 %v660, %v759
        %761 = vmatprep.mubr.f32.mxu0 0.0
        %762 = vmatmul.mubr.f32.gmra.mrb[0].mxu0 %v677
        %v763 = vpop.f32.mrb[0].mxu0
        %v764 = vadd.f32 %v665, %v763
        %v765 = vpop.f32.mrb[0].mxu0
        %v766 = vadd.f32 %v665, %v765
        %767 = vdwg.mxu0
        %v768 = vmax.f32 %v746, 0.0
        %v769 = vmax.f32 %v748, 0.0
        %v770 = vmax.f32 %v752, 0.0
        %v771 = vmax.f32 %v754, 0.0
        %v772 = vmax.f32 %v758, 0.0
        %v773 = vmax.f32 %v760, 0.0
        %v774 = vmax.f32 %v764, 0.0
        %v775 = vmax.f32 %v766, 0.0
        %v776 = vld [vmem:[%s7] sm:$0xff]
        %v777 = vld [vmem:[%s8] sm:$0xff]
        %779 = vset.pattern.permute.xlu0 0
        %780 = vperm.xlu0 %779, %v777
        %v781 = vpop.permute.xlu0 %780
        %v784 = vsel %vm529, %v776, 0
        %786 = vmatprep.subr.mxu0 %v769
        %787 = vmatpush1.msra.mxu0 %v768
        %788 = vmatprep.subr.mxu0 %v771
        %789 = vmatpush1.msra.mxu0 %v770
        %790 = vmatprep.subr.mxu0 %v773
        %791 = vmatpush1.msra.mxu0 %v772
        %792 = vmatprep.subr.mxu0 %v775
        %793 = vmatpush1.msra.mxu0 %v774
        %794 = vmatprep.subr.mxu0 0.0
        %795 = vmatpush1.msra.mxu0 0.0
        %796 = vmatprep.subr.mxu0 0.0
        %797 = vmatpush1.msra.mxu0 0.0
        %798 = vmatprep.subr.mxu0 0.0
        %799 = vmatpush1.msra.mxu0 0.0
        %800 = vmatprep.subr.mxu0 0.0
        %801 = vmatpush1.msra.mxu0 0.0
        %802 = vmatprep.subr.mxu0 0.0
        %803 = vmatpush1.msra.mxu0 0.0
        %804 = vmatprep.subr.mxu0 0.0
        %805 = vmatpush1.msra.mxu0 0.0
        %806 = vmatprep.subr.mxu0 0.0
        %807 = vmatpush1.msra.mxu0 0.0
        %808 = vmatprep.subr.mxu0 0.0
        %809 = vmatpush1.msra.mxu0 0.0
        %810 = vmatprep.subr.mxu0 0.0
        %811 = vmatpush1.msra.mxu0 0.0
        %812 = vmatprep.subr.mxu0 0.0
        %813 = vmatpush1.msra.mxu0 0.0
        %814 = vmatprep.subr.mxu0 0.0
        %815 = vmatpush1.msra.mxu0 0.0
        %816 = vmatprep.subr.mxu0 0.0
        %817 = vmatpush1.msra.mxu0 0.0
        %818 = vmatprep.subr.mxu0 0.0
        %819 = vmatpush1.msra.mxu0 0.0
        %820 = vmatprep.subr.mxu0 0.0
        %821 = vmatpush1.msra.mxu0 0.0
        %822 = vmatprep.subr.mxu0 0.0
        %823 = vmatpush1.msra.mxu0 0.0
        %824 = vmatprep.subr.mxu0 0.0
        %825 = vmatpush1.msra.mxu0 0.0
        %826 = vmatprep.subr.mxu0 0.0
        %827 = vmatpush1.msra.mxu0 0.0
        %828 = vmatprep.subr.mxu0 0.0
        %829 = vmatpush1.msra.mxu0 0.0
        %830 = vmatprep.subr.mxu0 0.0
        %831 = vmatpush1.msra.mxu0 0.0
        %832 = vmatprep.subr.mxu0 0.0
        %833 = vmatpush1.msra.mxu0 0.0
        %834 = vmatprep.subr.mxu0 0.0
        %835 = vmatpush1.msra.mxu0 0.0
        %836 = vmatprep.subr.mxu0 0.0
        %837 = vmatpush1.msra.mxu0 0.0
        %838 = vmatprep.subr.mxu0 0.0
        %839 = vmatpush1.msra.mxu0 0.0
        %840 = vmatprep.subr.mxu0 0.0
        %841 = vmatpush1.msra.mxu0 0.0
        %842 = vmatprep.subr.mxu0 0.0
        %843 = vmatpush1.msra.mxu0 0.0
        %844 = vmatprep.subr.mxu0 0.0
        %845 = vmatpush1.msra.mxu0 0.0
        %846 = vmatprep.subr.mxu0 0.0
        %847 = vmatpush1.msra.mxu0 0.0
        %848 = vmatprep.subr.mxu0 0.0
        %849 = vmatpush1.msra.mxu0 0.0
        %850 = vmatprep.mubr.f32.mxu0 0.0
        %851 = vmatmul.mubr.f32.gmra.mrb[0].mxu0 %v784
        %v852 = vpop.f32.mrb[0].mxu0
        %v853 = vadd.f32 %v781, %v852
        %v854 = vpop.f32.mrb[0].mxu0
        %v855 = vadd.f32 %v781, %v854
        %856 = vdwg.mxu0
        %v857 = vand.u32 2147483647, %v853
        %v858 = vand.u32 2147483647, %v855
        %v859 = vsub.f32 0.0, %v857
        %v860 = vsub.f32 0.0, %v858
        %v861 = vmul.f32 %v859, 1.442695
        %v862 = vpow.pop %v861
        %v863 = vmul.f32 %v860, 1.442695
        %v864 = vpow.pop %v863
        %v865 = vadd.f32 %v862, 1.0
        %v866 = vadd.f32 %v864, 1.0
        %v867 = vrcp.pop %v865
        %v868 = vrcp.pop %v866
        %vm869 = vcmp.ge.f32.partialorder %v853, 0.0
        %vm870 = vcmp.ge.f32.partialorder %v855, 0.0
        %v871 = vmul.f32 %v862, %v867
        %v872 = vmul.f32 %v864, %v868
        %v873 = vsel %vm869, %v867, %v871
        %v874 = vsel %vm870, %v868, %v872
        %875 = vst [vmem:[%s356] sm:$0xff] %v873
        %876 = vst [vmem:[%s356 + $0x8] sm:$0xff] %v874
        %s877 = sand.u32 %s225, 1
        %s878 = scalar_lea.sflag [#allocation4], %s877
        %s879 = sand.u32 %s225, 1
        %s880 = smul.addr %s879, 16
        %s881 = scalar_lea.vmem [#allocation3], %s880
        // Predicated region
        $region80: #{tpu_custom_call.1} parent=74 // pred_check
          %p882 = pneg %p235
        $region81: #{tpu_custom_call.1} parent=74 // pred_check_branch
          %884 = sbr.rel (%p882) target = $region83
        $region82: #{tpu_custom_call.1} parent=74 // pred_region
          %s885 = smul.u32 2, %s23
          %s887 = ssub.s32 256, 256
          %888 = vsyncadd %s878, %s887
          %s889 = smul.addr %s885, 128
          %s890 = scalar_lea.hbm %s9, %s889
          %s892 = sshll.u32 %s881, 4
          %s893 = int_to_ptr.vmem [resolvable:$true] %s892
          %895 = dma.vmem_to_hbm [thread:$0]  %s893, 256, %s890, %s878
        $region83: #{tpu_custom_call.1} parent=74 // pred_fallthru
          _
      $region75: #{tpu_custom_call.1} parent=5 // pred_fallthru
        _
      %p896 = scmp.le.s32.totalorder 2, %s18
      // Predicated region
      $region84: #{tpu_custom_call.1} parent=5 // pred_check
        %p897 = pneg %p896
      $region85: #{tpu_custom_call.1} parent=5 // pred_check_branch
        %899 = sbr.rel (%p897) target = $region87
      $region86: #{tpu_custom_call.1} parent=5 // pred_region
        %s900 = ssub.s32 %s18, 2
        // Predicated region
        $region88: #{tpu_custom_call.1} parent=86 // pred_check
          %p901 = pneg %p241
        $region89: #{tpu_custom_call.1} parent=86 // pred_check_branch
          %903 = sbr.rel (%p901) target = $region91
        $region90: #{tpu_custom_call.1} parent=86 // pred_region
          %s904 = sand.u32 %s226, 1
          %s905 = scalar_lea.sflag [#allocation4], %s904
          %s906 = sand.u32 %s226, 1
          %s907 = smul.addr %s906, 16
          %s908 = scalar_lea.vmem [#allocation3], %s907
          %909 = dma.done %s905, 256
        $region91: #{tpu_custom_call.1} parent=86 // pred_fallthru
          _
      $region87: #{tpu_custom_call.1} parent=5 // pred_fallthru
        _
    $region6: #{tpu_custom_call.1} parent=1 // loop_footer
      %s22 = sadd.s32 1, %s18
    $region7: #{tpu_custom_call.1} parent=1 // loop_footer_branch
      %17 = sbr.rel target = $region3
    $region8: #{tpu_custom_call.1} parent=1 // loop_exit
      _
    %910 = vsyncpa [#allocation4], 1
    %s911 = scalar_lea.sflag [#allocation4], 1
    %912 = vsyncpa %s911, 1

</llo_original>
